<compile_context>
chip_gen: v7x
topology: tpu7x:2x2x1
jax: 0.10.0
libtpu: 0.0.40
codegen_flags: <defaults>
</compile_context>

<pallas_src>
import functools

import jax
import jax.numpy as jnp
from jax.experimental import pallas as pl
from jax.experimental.pallas import tpu as pltpu

_LANES = 128
_SUBLANES = 8
_MAX_BLOCK_ROWS = 2048      # 2048 x 128 x 4B = 1 MiB per f32 input block
_MAX_CORE_SPLITS = 2        # v7x has 2 TensorCores; harmless on v5e/v6e


def _round_up(x, m):
    return (x + m - 1) // m * m


def _rmse_kernel(yt_ref, yp_ref, out_ref, acc_ref, *,
                 n_rows, block_rows, steps_per_core):
    c = pl.program_id(0)          # core-split ("parallel") axis
    i = pl.program_id(1)          # reduction ("arbitrary") axis

    @pl.when(i == 0)
    def _():
        acc_ref[...] = jnp.zeros_like(acc_ref)

    # Cast to f32 in-kernel (matches y_true.float(); keeps HBM reads narrow
    # for sub-32-bit inputs).
    d = yp_ref[...].astype(jnp.float32) - yt_ref[...].astype(jnp.float32)
    sq = d * d

    # Mask rows outside the logical array: covers the ragged last block and the
    # fully-redundant (clamped) blocks created by the core split. Pure VPU work,
    # fully hidden under the HBM reads.
    base_row = (c * steps_per_core + i) * block_rows
    row_ids = jax.lax.broadcasted_iota(jnp.int32, (block_rows, _LANES), 0)
    sq = jnp.where(base_row + row_ids < n_rows, sq, 0.0)

    # Fold this block down to one (8, 128) tile of partial sums: the reshape is
    # layout-trivial and the sum over the leading axis is plain vreg adds (VPU),
    # so no XLU traffic and only a 4 KiB accumulator in VMEM.
    acc_ref[...] += jnp.sum(
        sq.reshape(block_rows // _SUBLANES, _SUBLANES, _LANES), axis=0)

    @pl.when(i == pl.num_programs(1) - 1)
    def _():
        out_ref[...] = acc_ref[...]   # (8, 128) partial SSE tile for this split


def rmse_loss(y_true, y_pred, loss_weight=1.0):
    """Returns {'loss_reg': loss_weight * sqrt(mean((y_pred - y_true)^2))}."""
    assert y_true.shape == y_pred.shape, "y_true / y_pred shape mismatch"
    n_elems = y_true.size

    # Glue: flatten in native dtype; pad the ragged tail to a (8*128)-element
    # multiple only when needed (zero pad adds 0 to the SSE; the mean divides by
    # the true n_elems). Padding to 1024 keeps the row count a sublane multiple,
    # so every block shape is (8,128)-aligned and never exceeds the array.
    yt = jnp.ravel(y_true)
    yp = jnp.ravel(y_pred)
    padded = _round_up(n_elems, _SUBLANES * _LANES)
    if padded != n_elems:
        yt = jnp.pad(yt, (0, padded - n_elems))
        yp = jnp.pad(yp, (0, padded - n_elems))
    rows = padded // _LANES
    yt2 = yt.reshape(rows, _LANES)
    yp2 = yp.reshape(rows, _LANES)

    # Tile sizing: biggest block that fits comfortably in VMEM across chips.
    block_rows = min(_MAX_BLOCK_ROWS, rows)
    n_blocks = (rows + block_rows - 1) // block_rows
    # Only split across cores when there is real work to split; avoids a fully
    # redundant (masked) block fetch for small inputs on 1-TC chips.
    num_splits = _MAX_CORE_SPLITS if n_blocks >= _MAX_CORE_SPLITS else 1
    steps_per_core = (n_blocks + num_splits - 1) // num_splits

    def in_index_map(c, i):
        b = c * steps_per_core + i
        # Clamp redundant block indices; their contribution is masked in-kernel.
        return (jnp.minimum(b, n_blocks - 1), 0)

    kernel = functools.partial(
        _rmse_kernel,
        n_rows=rows,
        block_rows=block_rows,
        steps_per_core=steps_per_core,
    )

    out = pl.pallas_call(
        kernel,
        out_shape=jax.ShapeDtypeStruct(
            (num_splits * _SUBLANES, _LANES), jnp.float32),
        grid_spec=pltpu.PrefetchScalarGridSpec(
            num_scalar_prefetch=0,
            grid=(num_splits, steps_per_core),
            in_specs=[
                pl.BlockSpec((block_rows, _LANES), in_index_map),
                pl.BlockSpec((block_rows, _LANES), in_index_map),
            ],
            out_specs=pl.BlockSpec((_SUBLANES, _LANES), lambda c, i: (c, 0)),
            scratch_shapes=[pltpu.VMEM((_SUBLANES, _LANES), jnp.float32)],
        ),
        compiler_params=pltpu.CompilerParams(
            dimension_semantics=("parallel", "arbitrary")),
    )(yt2, yp2)

    # Tiny lane-dense slab of per-split partial sums; finish the reduction,
    # mean and sqrt on the scalar side.
    sse = jnp.sum(out)
    loss = jnp.float32(loss_weight) * jnp.sqrt(sse / jnp.float32(n_elems))
    return {"loss_reg": loss}


if __name__ == "__main__":
    key = jax.random.PRNGKey(0)
    k1, k2 = jax.random.split(key)
    # NCHW example, matching a typical regression-loss call site.
    y_true = jax.random.normal(k1, (2, 4, 16, 16), dtype=jnp.float32)
    y_pred = jax.random.normal(k2, (2, 4, 16, 16), dtype=jnp.float32)

    loss_dict = rmse_loss(y_true, y_pred, loss_weight=1.0)
    loss = jax.block_until_ready(loss_dict["loss_reg"])

    # Reference check (pure JAX).
    ref = jnp.sqrt(jnp.mean((y_pred - y_true.astype(jnp.float32)) ** 2))
    assert jnp.allclose(loss, ref, rtol=1e-5, atol=1e-6), (loss, ref)

    print("KERNEL_OK")
</pallas_src>

<mosaic_0001>
module attributes {stable_mosaic.version = 11 : i64} {
  func.func @_rmse_kernel(%arg0: i32, %arg1: i32, %arg2: memref<16x128xf32, #tpu.memory_space<vmem>>, %arg3: memref<16x128xf32, #tpu.memory_space<vmem>>, %arg4: memref<8x128xf32, #tpu.memory_space<vmem>>, %arg5: memref<8x128xf32, #tpu.memory_space<vmem>>) attributes {dimension_semantics = [#tpu.dimension_semantics<parallel>, #tpu.dimension_semantics<arbitrary>], iteration_bounds = array<i64: 1, 1>, scalar_prefetch = 0 : i64, scratch_operands = 1 : i64, tpu.core_type = #tpu.core_type<tc>, window_params = [{transform_indices = @transform_0, window_bounds = array<i64: 16, 128>}, {transform_indices = @transform_1, window_bounds = array<i64: 16, 128>}, {transform_indices = @transform_2, window_bounds = array<i64: 8, 128>}]} {
    %c0_i32 = arith.constant 0 : i32
    %0 = arith.cmpi eq, %arg1, %c0_i32 : i32
    %1 = arith.extui %0 : i1 to i32
    %c0_i32_0 = arith.constant 0 : i32
    %2 = arith.cmpi ne, %1, %c0_i32_0 : i32
    scf.if %2 {
      %cst_12 = arith.constant 0.000000e+00 : f32
      %25 = vector.broadcast %cst_12 : f32 to vector<8x128xf32>
      %c0_13 = arith.constant 0 : index
      %c0_14 = arith.constant 0 : index
      %26 = vector.load %arg5[%c0_13, %c0_14] : memref<8x128xf32, #tpu.memory_space<vmem>>, vector<8x128xf32>
      tpu.vector_store %arg5[%c0_13, %c0_14], %25 {strides = array<i32>} : memref<8x128xf32, #tpu.memory_space<vmem>>, vector<8x128xf32>,
    } else {
    }
    %c0 = arith.constant 0 : index
    %c0_1 = arith.constant 0 : index
    %3 = vector.load %arg3[%c0, %c0_1] : memref<16x128xf32, #tpu.memory_space<vmem>>, vector<16x128xf32>
    %c0_2 = arith.constant 0 : index
    %c0_3 = arith.constant 0 : index
    %4 = vector.load %arg2[%c0_2, %c0_3] : memref<16x128xf32, #tpu.memory_space<vmem>>, vector<16x128xf32>
    %5 = arith.subf %3, %4 : vector<16x128xf32>
    %6 = arith.mulf %5, %5 : vector<16x128xf32>
    %c1_i32 = arith.constant 1 : i32
    %7 = arith.muli %arg0, %c1_i32 : i32
    %8 = arith.addi %7, %arg1 : i32
    %c16_i32 = arith.constant 16 : i32
    %9 = arith.muli %8, %c16_i32 : i32
    %10 = tpu.iota {dimensions = array<i32: 0>} : vector<16x128xi32>
    %11 = vector.broadcast %9 : i32 to vector<16x128xi32>
    %12 = arith.addi %11, %10 : vector<16x128xi32>
    %c16_i32_4 = arith.constant 16 : i32
    %13 = vector.broadcast %c16_i32_4 : i32 to vector<16x128xi32>
    %14 = arith.cmpi slt, %12, %13 : vector<16x128xi32>
    %cst = arith.constant 0.000000e+00 : f32
    %15 = vector.broadcast %cst : f32 to vector<16x128xf32>
    %16 = arith.select %14, %6, %15 : vector<16x128xi1>, vector<16x128xf32>
    %c0_5 = arith.constant 0 : index
    %c0_6 = arith.constant 0 : index
    %17 = vector.load %arg5[%c0_5, %c0_6] : memref<8x128xf32, #tpu.memory_space<vmem>>, vector<8x128xf32>
    %18 = vector.shape_cast %16 : vector<16x128xf32> to vector<2x8x128xf32>
    %cst_7 = arith.constant dense<0.000000e+00> : vector<8x128xf32>
    %19 = vector.multi_reduction <add>, %18, %cst_7 [0] : vector<2x8x128xf32> to vector<8x128xf32>
    %20 = arith.addf %17, %19 : vector<8x128xf32>
    %c0_8 = arith.constant 0 : index
    %c0_9 = arith.constant 0 : index
    %21 = vector.load %arg5[%c0_8, %c0_9] : memref<8x128xf32, #tpu.memory_space<vmem>>, vector<8x128xf32>
    tpu.vector_store %arg5[%c0_8, %c0_9], %20 {strides = array<i32>} : memref<8x128xf32, #tpu.memory_space<vmem>>, vector<8x128xf32>,
    %c0_i32_10 = arith.constant 0 : i32
    %22 = arith.cmpi eq, %arg1, %c0_i32_10 : i32
    %23 = arith.extui %22 : i1 to i32
    %c0_i32_11 = arith.constant 0 : i32
    %24 = arith.cmpi ne, %23, %c0_i32_11 : i32
    scf.if %24 {
      %c0_12 = arith.constant 0 : index
      %c0_13 = arith.constant 0 : index
      %25 = vector.load %arg5[%c0_12, %c0_13] : memref<8x128xf32, #tpu.memory_space<vmem>>, vector<8x128xf32>
      %c0_14 = arith.constant 0 : index
      %c0_15 = arith.constant 0 : index
      %26 = vector.load %arg4[%c0_14, %c0_15] : memref<8x128xf32, #tpu.memory_space<vmem>>, vector<8x128xf32>
      tpu.vector_store %arg4[%c0_14, %c0_15], %25 {strides = array<i32>} : memref<8x128xf32, #tpu.memory_space<vmem>>, vector<8x128xf32>,
    } else {
    }
    return
  }
  func.func @transform_0(%arg0: i32, %arg1: i32) -> (i32, i32) {
    %c1_i32 = arith.constant 1 : i32
    %0 = arith.muli %arg0, %c1_i32 : i32
    %1 = arith.addi %0, %arg1 : i32
    %c0_i32 = arith.constant 0 : i32
    %2 = arith.minsi %1, %c0_i32 : i32
    %c0_i32_0 = arith.constant 0 : i32
    %c0_i32_1 = arith.constant 0 : i32
    return %2, %c0_i32_0 : i32, i32
  }
  func.func @transform_1(%arg0: i32, %arg1: i32) -> (i32, i32) {
    %c1_i32 = arith.constant 1 : i32
    %0 = arith.muli %arg0, %c1_i32 : i32
    %1 = arith.addi %0, %arg1 : i32
    %c0_i32 = arith.constant 0 : i32
    %2 = arith.minsi %1, %c0_i32 : i32
    %c0_i32_0 = arith.constant 0 : i32
    %c0_i32_1 = arith.constant 0 : i32
    return %2, %c0_i32_0 : i32, i32
  }
  func.func @transform_2(%arg0: i32, %arg1: i32) -> (i32, i32) {
    %c0_i32 = arith.constant 0 : i32
    %c0_i32_0 = arith.constant 0 : i32
    return %arg0, %c0_i32 : i32, i32
  }
}

</mosaic_0001>

<llo_original>
// kernel: tpu_custom_call.1
$region0: #{tpu_custom_call.1}
  #allocation0 [shape = 'u32[]', space=smem, size = 0x4, offset = 0x4, fixed_abs, tag = 'smem constant byte address 0x4 - core index']
  #allocation1 [shape = 'u32[144,128]{1,0:T(1,128)}', space=vmem, size = 0x12000, scoped, tag = 'internal scratch']
  #allocation2 [shape = 'f32[8,128]{1,0:T(8,128)}', space=vmem, size = 0x1000, scoped, tag = 'scratch operand']
  %s0 = inlined_call_operand.hbm [shape: f32[16,128], index: 0, kind: input, shape index: {}]
  %s1 = inlined_call_operand.hbm [shape: f32[16,128], index: 1, kind: input, shape index: {}]
  %s2 = inlined_call_operand.hbm [shape: f32[8,128], index: 2, kind: output, shape index: {}]
  %s3 = sld [smem:[#allocation0]]
  $region34: #{tpu_custom_call.1} parent=0
    _
  %s5 = ssub.s32 1, %s3
  %s6 = scalar_select 0, %s5, %s3
  $region1: #{tpu_custom_call.1} parent=0
    #allocation3 [shape = 'u8[8192]{0}', space=vmem, size = 0x2000, scoped, tag = 'input window, operand 0, single buffered']
    #allocation4 [shape = 's32[1]{0}', space=sflag, size = 0x4, scoped, tag = 'scoped memory for tpu_custom_call.1']
    #allocation5 [shape = 's32[1]{0}', space=sflag, size = 0x4, scoped, tag = 'scoped memory for tpu_custom_call.1']
    #allocation6 [shape = 'u8[8192]{0}', space=vmem, size = 0x2000, scoped, tag = 'input window, operand 1, single buffered']
    #allocation7 [shape = 's32[1]{0}', space=sflag, size = 0x4, scoped, tag = 'scoped memory for tpu_custom_call.1']
    #allocation8 [shape = 'u8[4096]{0}', space=vmem, size = 0x1000, scoped, tag = 'output window, operand 0, single buffered']
    %7 = vsyncpa [#allocation4], 0
    %8 = vsyncpa [#allocation7], 0
    %9 = vsyncpa [#allocation5], 0
    // Predicated region
    $region2: #{tpu_custom_call.1} parent=1 // pred_check
      _
    $region3: #{tpu_custom_call.1} parent=1 // pred_check_branch
      %11 = sbr.rel (0) target = $region5
    $region4: #{tpu_custom_call.1} parent=1 // pred_region
      %s12 = sadd.s32 0, 0
      %p13 = scmp.lt.s32.totalorder %s12, 0
      %s14 = scalar_select %p13, %s12, 0
      %s15 = smul.u32 2, %s14
      %s17 = ssub.s32 256, 256
      %18 = vsyncadd [#allocation4], %s17
      %s19 = smul.addr %s15, 128
      %s20 = scalar_lea.hbm %s0, %s19
      %s21 = sshll.u32 [#allocation3], 4
      %s22 = int_to_ptr.vmem [resolvable:$true] %s21
      %27 = dma.hbm_to_vmem [thread:$0]  %s20, 256, %s22, [#allocation4], 128, 128, 8
    $region5: #{tpu_custom_call.1} parent=1 // pred_fallthru
      _
    // Predicated region
    $region6: #{tpu_custom_call.1} parent=1 // pred_check
      _
    $region7: #{tpu_custom_call.1} parent=1 // pred_check_branch
      %29 = sbr.rel (0) target = $region9
    $region8: #{tpu_custom_call.1} parent=1 // pred_region
      %s30 = sadd.s32 0, 0
      %p31 = scmp.lt.s32.totalorder %s30, 0
      %s32 = scalar_select %p31, %s30, 0
      %s33 = smul.u32 2, %s32
      %s35 = ssub.s32 256, 256
      %36 = vsyncadd [#allocation7], %s35
      %s37 = smul.addr %s33, 128
      %s38 = scalar_lea.hbm %s1, %s37
      %s39 = sshll.u32 [#allocation6], 4
      %s40 = int_to_ptr.vmem [resolvable:$true] %s39
      %45 = dma.hbm_to_vmem [thread:$0]  %s38, 256, %s40, [#allocation7], 128, 128, 8
    $region9: #{tpu_custom_call.1} parent=1 // pred_fallthru
      _
    // Predicated region
    $region10: #{tpu_custom_call.1} parent=1 // pred_check
      _
    $region11: #{tpu_custom_call.1} parent=1 // pred_check_branch
      %47 = sbr.rel (0) target = $region13
    $region12: #{tpu_custom_call.1} parent=1 // pred_region
      %48 = dma.done [#allocation4], 256
    $region13: #{tpu_custom_call.1} parent=1 // pred_fallthru
      _
    // Predicated region
    $region14: #{tpu_custom_call.1} parent=1 // pred_check
      _
    $region15: #{tpu_custom_call.1} parent=1 // pred_check_branch
      %50 = sbr.rel (0) target = $region17
    $region16: #{tpu_custom_call.1} parent=1 // pred_region
      %51 = dma.done [#allocation7], 256
    $region17: #{tpu_custom_call.1} parent=1 // pred_fallthru
      _
    %s52 = sadd.s32 0, 0
    %p53 = scmp.lt.s32.totalorder %s52, 0
    %s54 = scalar_select %p53, %s52, 0
    %s55 = smul.u32 2, %s54
    %s56 = sadd.s32 0, 0
    %p57 = scmp.lt.s32.totalorder %s56, 0
    %s58 = scalar_select %p57, %s56, 0
    %s59 = smul.u32 2, %s58
    %p60 = scmp.eq.s32.totalorder 0, 0
    // Predicated region
    $region18: #{tpu_custom_call.1} parent=1 // pred_check
      %p61 = pneg %p60
    $region19: #{tpu_custom_call.1} parent=1 // pred_check_branch
      %63 = sbr.rel (%p61) target = $region21
    $region20: #{tpu_custom_call.1} parent=1 // pred_region
      %64 = vst [vmem:[#allocation2] sm:$0xff] 0.0
    $region21: #{tpu_custom_call.1} parent=1 // pred_fallthru
      _
    %v65 = vld [vmem:[#allocation6] sm:$0xff]
    %v66 = vld [vmem:[#allocation6 + $0x8] sm:$0xff]
    %v67 = vld [vmem:[#allocation3] sm:$0xff]
    %v68 = vld [vmem:[#allocation3 + $0x8] sm:$0xff]
    %v69 = vsub.f32 %v65, %v67
    %v70 = vsub.f32 %v66, %v68
    %v71 = vmul.f32 %v69, %v69
    %v72 = vmul.f32 %v70, %v70
    %s73 = sadd.s32 0, 0
    %s74 = smul.u32 %s73, 16
    %v75 = vlaneseq
    %v76 = vshrl.u32 %v75, 7
    %v77 = vadd.s32 %v76, 8
    %v78 = vstv %s74
    %v79 = vadd.s32 %v78, %v76
    %v80 = vadd.s32 %v78, %v77
    %vm81 = vcmp.lt.s32.totalorder %v79, 16
    %vm82 = vcmp.lt.s32.totalorder %v80, 16
    %v83 = vsel %vm81, %v71, 0.0
    %v84 = vsel %vm82, %v72, 0.0
    %v85 = vld [vmem:[#allocation2] sm:$0xff]
    %v86 = vadd.f32 %v83, %v84
    %v87 = vadd.f32 %v85, %v86
    %88 = vst [vmem:[#allocation2] sm:$0xff] %v87
    // Predicated region
    $region22: #{tpu_custom_call.1} parent=1 // pred_check
      %p89 = pneg %p60
    $region23: #{tpu_custom_call.1} parent=1 // pred_check_branch
      %91 = sbr.rel (%p89) target = $region25
    $region24: #{tpu_custom_call.1} parent=1 // pred_region
      %v92 = vld [vmem:[#allocation2] sm:$0xff]
      %93 = vst [vmem:[#allocation8] sm:$0xff] %v92
    $region25: #{tpu_custom_call.1} parent=1 // pred_fallthru
      _
    // Predicated region
    $region26: #{tpu_custom_call.1} parent=1 // pred_check
      _
    $region27: #{tpu_custom_call.1} parent=1 // pred_check_branch
      %95 = sbr.rel (0) target = $region29
    $region28: #{tpu_custom_call.1} parent=1 // pred_region
      %s97 = ssub.s32 128, 128
      %98 = vsyncadd [#allocation5], %s97
      %s100 = sshll.u32 [#allocation8], 4
      %s101 = int_to_ptr.vmem [resolvable:$true] %s100
      %103 = dma.vmem_to_hbm [thread:$0]  %s101, 128, %s2, [#allocation5]
    $region29: #{tpu_custom_call.1} parent=1 // pred_fallthru
      _
    // Predicated region
    $region30: #{tpu_custom_call.1} parent=1 // pred_check
      _
    $region31: #{tpu_custom_call.1} parent=1 // pred_check_branch
      %105 = sbr.rel (0) target = $region33
    $region32: #{tpu_custom_call.1} parent=1 // pred_region
      %106 = dma.done [#allocation5], 128
    $region33: #{tpu_custom_call.1} parent=1 // pred_fallthru
      _
    %107 = vsyncpa [#allocation4], 1
    %108 = vsyncpa [#allocation7], 1
    %109 = vsyncpa [#allocation5], 1

</llo_original>
